<compile_context>
chip_gen: v7x
topology: tpu7x:2x2x1
jax: 0.10.0
libtpu: 0.0.40
codegen_flags: <defaults>
</compile_context>

<pallas_src>
import jax
import jax.numpy as jnp
from jax import lax
from jax.experimental import pallas as pl
from jax.experimental.pallas import tpu as pltpu

D_MODEL = 32
NHEAD = 4
D_K = D_MODEL // NHEAD
SEQ = 8
BATCH = 2


def mha_kernel(x_ref, wqkv_ref, wo_ref, bo_ref, out_ref):
    # x_ref:    (1, T, D)   one batch element per grid step
    # wqkv_ref: (D, 3*D)    columns = [ Wq^T | Wk^T | Wv^T ] (torch head layout preserved)
    # wo_ref:   (D, D)      Wo^T
    # bo_ref:   (1, D)
    # out_ref:  (1, T, D)
    D = x_ref.shape[2]
    DK = D // NHEAD

    x = x_ref[0]                                                      # (T, D)

    # Fused QKV projection: one full-width MXU matmul (96 output lanes in one push).
    qkv = jnp.dot(x, wqkv_ref[...], preferred_element_type=jnp.float32)   # (T, 3D)

    scale = 1.0 / (DK ** 0.5)
    head_outs = []
    for h in range(NHEAD):                                            # unrolled, H = 4
        # Scale folded into q: O(T*DK) multiplies instead of O(T*T).
        qh = qkv[:, h * DK:(h + 1) * DK] * scale                      # (T, DK)
        kh = qkv[:, D + h * DK:D + (h + 1) * DK]                      # (T, DK)
        vh = qkv[:, 2 * D + h * DK:2 * D + (h + 1) * DK]              # (T, DK)

        # q @ k^T expressed as an NT contraction on the feature dim (no k^T materialized).
        s = lax.dot_general(qh, kh, (((1,), (1,)), ((), ())),
                            preferred_element_type=jnp.float32)       # (T, T)

        # Numerically-stable exact softmax (denominator is O(T) -> exact division is free).
        m = jnp.max(s, axis=-1, keepdims=True)
        p = jnp.exp(s - m)
        attn = p / jnp.sum(p, axis=-1, keepdims=True)

        head_outs.append(jnp.dot(attn, vh,
                                 preferred_element_type=jnp.float32))  # (T, DK)

    # concat(heads) @ Wo^T + b  — single full-depth (D) contraction, exactly the module's
    # fc_out, instead of H shallow matmuls + a VPU sum over heads.
    o = jnp.concatenate(head_outs, axis=-1)                           # (T, D)
    out = jnp.dot(o, wo_ref[...], preferred_element_type=jnp.float32) + bo_ref[...]
    out_ref[0] = out.astype(out_ref.dtype)


def fuse_qkv_weights(wq_t, wk_t, wv_t):
    # Done ONCE at setup (not per call): kernel-ready fused QKV weight (D, 3*D).
    return jnp.concatenate([wq_t, wk_t, wv_t], axis=1)


def multihead_attention(x, wqkv_t, wo_t, bo):
    # TODO(synk): the module's optional `mask` argument is not exercised here; a user mask
    # would be passed as an extra (T, T) additive-bias input and added to the scores.
    B, T, D = x.shape
    return pl.pallas_call(
        mha_kernel,
        out_shape=jax.ShapeDtypeStruct((B, T, D), jnp.float32),
        grid=(B,),
        in_specs=[
            pl.BlockSpec((1, T, D), lambda b: (b, 0, 0)),       # x: one batch row per step
            pl.BlockSpec((D, 3 * D), lambda b: (0, 0)),         # fused QKV weight, resident
            pl.BlockSpec((D, D), lambda b: (0, 0)),             # Wo^T, resident
            pl.BlockSpec((1, D), lambda b: (0, 0)),             # output bias, resident
        ],
        out_specs=pl.BlockSpec((1, T, D), lambda b: (b, 0, 0)),
        compiler_params=pltpu.CompilerParams(
            dimension_semantics=("parallel",)),                 # batch shards across TCs
    )(x, wqkv_t, wo_t, bo.reshape(1, D))


def reference(x, wq_t, wk_t, wv_t, wo_t, bo):
    # Mirrors the PyTorch module exactly (mask=None path).
    B, T, D = x.shape
    q = (x @ wq_t).reshape(B, T, NHEAD, D_K).transpose(0, 2, 1, 3)
    k = (x @ wk_t).reshape(B, T, NHEAD, D_K).transpose(0, 2, 1, 3)
    v = (x @ wv_t).reshape(B, T, NHEAD, D_K).transpose(0, 2, 1, 3)
    scores = jnp.einsum("bhqd,bhkd->bhqk", q, k) / (D_K ** 0.5)
    attn = jax.nn.softmax(scores, axis=-1)
    out = jnp.einsum("bhqk,bhkd->bhqd", attn, v)
    out = out.transpose(0, 2, 1, 3).reshape(B, T, D)
    return out @ wo_t + bo


if __name__ == "__main__":
    key = jax.random.PRNGKey(0)
    kx, kq, kk, kv, ko, kb = jax.random.split(key, 6)

    x = jax.random.normal(kx, (BATCH, SEQ, D_MODEL), dtype=jnp.float32)
    # nn.Linear(d_model, d_model) weights are (out, in) in torch; stored transposed (in, out)
    # so the math inside the kernel is plain `x @ W`.
    scale = 1.0 / (D_MODEL ** 0.5)
    wq_t = jax.random.uniform(kq, (D_MODEL, D_MODEL), jnp.float32, -scale, scale)
    wk_t = jax.random.uniform(kk, (D_MODEL, D_MODEL), jnp.float32, -scale, scale)
    wv_t = jax.random.uniform(kv, (D_MODEL, D_MODEL), jnp.float32, -scale, scale)
    wo_t = jax.random.uniform(ko, (D_MODEL, D_MODEL), jnp.float32, -scale, scale)
    bo = jax.random.uniform(kb, (D_MODEL,), jnp.float32, -scale, scale)

    # One-time weight fusion (hoisted out of the hot path).
    wqkv_t = fuse_qkv_weights(wq_t, wk_t, wv_t)

    out = multihead_attention(x, wqkv_t, wo_t, bo)
    out = jax.block_until_ready(out)

    ref = reference(x, wq_t, wk_t, wv_t, wo_t, bo)
    assert out.shape == (BATCH, SEQ, D_MODEL)
    # Exact softmax + f32 accumulation -> tight tolerance again (only MXU accumulation
    # order differs from the XLA reference).
    assert jnp.allclose(out, ref, atol=1e-4, rtol=1e-4), "mismatch vs reference"

    print("KERNEL_OK")
</pallas_src>

<mosaic_0001>
module attributes {stable_mosaic.version = 11 : i64} {
  func.func @mha_kernel(%arg0: i32, %arg1: memref<1x8x32xf32, #tpu.memory_space<vmem>>, %arg2: memref<32x96xf32, #tpu.memory_space<vmem>>, %arg3: memref<32x32xf32, #tpu.memory_space<vmem>>, %arg4: memref<1x32xf32, #tpu.memory_space<vmem>>, %arg5: memref<1x8x32xf32, #tpu.memory_space<vmem>>) attributes {dimension_semantics = [#tpu.dimension_semantics<parallel>], iteration_bounds = array<i64: 2>, scalar_prefetch = 0 : i64, scratch_operands = 0 : i64, tpu.core_type = #tpu.core_type<tc>, window_params = [{transform_indices = @transform_0, window_bounds = array<i64: 1, 8, 32>}, {pipeline_mode = #tpu.pipeline_mode<synchronous>, transform_indices = @transform_1, window_bounds = array<i64: 32, 96>}, {pipeline_mode = #tpu.pipeline_mode<synchronous>, transform_indices = @transform_2, window_bounds = array<i64: 32, 32>}, {pipeline_mode = #tpu.pipeline_mode<synchronous>, transform_indices = @transform_3, window_bounds = array<i64: 1, 32>}, {transform_indices = @transform_4, window_bounds = array<i64: 1, 8, 32>}]} {
    %c0 = arith.constant 0 : index
    %c0_0 = arith.constant 0 : index
    %c0_1 = arith.constant 0 : index
    %0 = vector.load %arg1[%c0, %c0_0, %c0_1] : memref<1x8x32xf32, #tpu.memory_space<vmem>>, vector<1x8x32xf32>
    %1 = vector.shape_cast %0 : vector<1x8x32xf32> to vector<8x32xf32>
    %c0_2 = arith.constant 0 : index
    %c0_3 = arith.constant 0 : index
    %2 = vector.load %arg2[%c0_2, %c0_3] : memref<32x96xf32, #tpu.memory_space<vmem>>, vector<32x96xf32>
    %cst = arith.constant dense<0.000000e+00> : vector<8x96xf32>
    %3 = tpu.matmul %1, %2, %cst {dimension_numbers = #tpu.dot_dimension_numbers<[1], [0], [0], [1], [0, 0, 1, 1], [], []>} : vector<8x32xf32>, vector<32x96xf32>, vector<8x96xf32> -> vector<8x96xf32>
    %4 = vector.extract_strided_slice %3 {offsets = [0, 0], sizes = [8, 8], strides = [1, 1]} : vector<8x96xf32> to vector<8x8xf32>
    %cst_4 = arith.constant 0.353553385 : f32
    %5 = vector.broadcast %cst_4 : f32 to vector<8x8xf32>
    %6 = arith.mulf %4, %5 : vector<8x8xf32>
    %7 = vector.extract_strided_slice %3 {offsets = [0, 32], sizes = [8, 8], strides = [1, 1]} : vector<8x96xf32> to vector<8x8xf32>
    %8 = vector.extract_strided_slice %3 {offsets = [0, 64], sizes = [8, 8], strides = [1, 1]} : vector<8x96xf32> to vector<8x8xf32>
    %cst_5 = arith.constant dense<0.000000e+00> : vector<8x8xf32>
    %9 = tpu.matmul %6, %7, %cst_5 {dimension_numbers = #tpu.dot_dimension_numbers<[1], [1], [0], [0], [0, 0, 1, 0], [], []>} : vector<8x8xf32>, vector<8x8xf32>, vector<8x8xf32> -> vector<8x8xf32>
    %cst_6 = arith.constant dense<0xFF800000> : vector<8xf32>
    %10 = vector.multi_reduction <maximumf>, %9, %cst_6 [1] : vector<8x8xf32> to vector<8xf32>
    %11 = vector.shape_cast %10 : vector<8xf32> to vector<8x1xf32>
    %12 = vector.broadcast %11 : vector<8x1xf32> to vector<8x8xf32>
    %13 = arith.subf %9, %12 : vector<8x8xf32>
    %14 = math.exp %13 : vector<8x8xf32>
    %cst_7 = arith.constant dense<0.000000e+00> : vector<8xf32>
    %15 = vector.multi_reduction <add>, %14, %cst_7 [1] : vector<8x8xf32> to vector<8xf32>
    %16 = vector.shape_cast %15 : vector<8xf32> to vector<8x1xf32>
    %17 = vector.broadcast %16 : vector<8x1xf32> to vector<8x8xf32>
    %18 = arith.divf %14, %17 : vector<8x8xf32>
    %cst_8 = arith.constant dense<0.000000e+00> : vector<8x8xf32>
    %19 = tpu.matmul %18, %8, %cst_8 {dimension_numbers = #tpu.dot_dimension_numbers<[1], [0], [0], [1], [0, 0, 1, 1], [], []>} : vector<8x8xf32>, vector<8x8xf32>, vector<8x8xf32> -> vector<8x8xf32>
    %20 = vector.extract_strided_slice %3 {offsets = [0, 8], sizes = [8, 8], strides = [1, 1]} : vector<8x96xf32> to vector<8x8xf32>
    %cst_9 = arith.constant 0.353553385 : f32
    %21 = vector.broadcast %cst_9 : f32 to vector<8x8xf32>
    %22 = arith.mulf %20, %21 : vector<8x8xf32>
    %23 = vector.extract_strided_slice %3 {offsets = [0, 40], sizes = [8, 8], strides = [1, 1]} : vector<8x96xf32> to vector<8x8xf32>
    %24 = vector.extract_strided_slice %3 {offsets = [0, 72], sizes = [8, 8], strides = [1, 1]} : vector<8x96xf32> to vector<8x8xf32>
    %cst_10 = arith.constant dense<0.000000e+00> : vector<8x8xf32>
    %25 = tpu.matmul %22, %23, %cst_10 {dimension_numbers = #tpu.dot_dimension_numbers<[1], [1], [0], [0], [0, 0, 1, 0], [], []>} : vector<8x8xf32>, vector<8x8xf32>, vector<8x8xf32> -> vector<8x8xf32>
    %cst_11 = arith.constant dense<0xFF800000> : vector<8xf32>
    %26 = vector.multi_reduction <maximumf>, %25, %cst_11 [1] : vector<8x8xf32> to vector<8xf32>
    %27 = vector.shape_cast %26 : vector<8xf32> to vector<8x1xf32>
    %28 = vector.broadcast %27 : vector<8x1xf32> to vector<8x8xf32>
    %29 = arith.subf %25, %28 : vector<8x8xf32>
    %30 = math.exp %29 : vector<8x8xf32>
    %cst_12 = arith.constant dense<0.000000e+00> : vector<8xf32>
    %31 = vector.multi_reduction <add>, %30, %cst_12 [1] : vector<8x8xf32> to vector<8xf32>
    %32 = vector.shape_cast %31 : vector<8xf32> to vector<8x1xf32>
    %33 = vector.broadcast %32 : vector<8x1xf32> to vector<8x8xf32>
    %34 = arith.divf %30, %33 : vector<8x8xf32>
    %cst_13 = arith.constant dense<0.000000e+00> : vector<8x8xf32>
    %35 = tpu.matmul %34, %24, %cst_13 {dimension_numbers = #tpu.dot_dimension_numbers<[1], [0], [0], [1], [0, 0, 1, 1], [], []>} : vector<8x8xf32>, vector<8x8xf32>, vector<8x8xf32> -> vector<8x8xf32>
    %36 = vector.extract_strided_slice %3 {offsets = [0, 16], sizes = [8, 8], strides = [1, 1]} : vector<8x96xf32> to vector<8x8xf32>
    %cst_14 = arith.constant 0.353553385 : f32
    %37 = vector.broadcast %cst_14 : f32 to vector<8x8xf32>
    %38 = arith.mulf %36, %37 : vector<8x8xf32>
    %39 = vector.extract_strided_slice %3 {offsets = [0, 48], sizes = [8, 8], strides = [1, 1]} : vector<8x96xf32> to vector<8x8xf32>
    %40 = vector.extract_strided_slice %3 {offsets = [0, 80], sizes = [8, 8], strides = [1, 1]} : vector<8x96xf32> to vector<8x8xf32>
    %cst_15 = arith.constant dense<0.000000e+00> : vector<8x8xf32>
    %41 = tpu.matmul %38, %39, %cst_15 {dimension_numbers = #tpu.dot_dimension_numbers<[1], [1], [0], [0], [0, 0, 1, 0], [], []>} : vector<8x8xf32>, vector<8x8xf32>, vector<8x8xf32> -> vector<8x8xf32>
    %cst_16 = arith.constant dense<0xFF800000> : vector<8xf32>
    %42 = vector.multi_reduction <maximumf>, %41, %cst_16 [1] : vector<8x8xf32> to vector<8xf32>
    %43 = vector.shape_cast %42 : vector<8xf32> to vector<8x1xf32>
    %44 = vector.broadcast %43 : vector<8x1xf32> to vector<8x8xf32>
    %45 = arith.subf %41, %44 : vector<8x8xf32>
    %46 = math.exp %45 : vector<8x8xf32>
    %cst_17 = arith.constant dense<0.000000e+00> : vector<8xf32>
    %47 = vector.multi_reduction <add>, %46, %cst_17 [1] : vector<8x8xf32> to vector<8xf32>
    %48 = vector.shape_cast %47 : vector<8xf32> to vector<8x1xf32>
    %49 = vector.broadcast %48 : vector<8x1xf32> to vector<8x8xf32>
    %50 = arith.divf %46, %49 : vector<8x8xf32>
    %cst_18 = arith.constant dense<0.000000e+00> : vector<8x8xf32>
    %51 = tpu.matmul %50, %40, %cst_18 {dimension_numbers = #tpu.dot_dimension_numbers<[1], [0], [0], [1], [0, 0, 1, 1], [], []>} : vector<8x8xf32>, vector<8x8xf32>, vector<8x8xf32> -> vector<8x8xf32>
    %52 = vector.extract_strided_slice %3 {offsets = [0, 24], sizes = [8, 8], strides = [1, 1]} : vector<8x96xf32> to vector<8x8xf32>
    %cst_19 = arith.constant 0.353553385 : f32
    %53 = vector.broadcast %cst_19 : f32 to vector<8x8xf32>
    %54 = arith.mulf %52, %53 : vector<8x8xf32>
    %55 = vector.extract_strided_slice %3 {offsets = [0, 56], sizes = [8, 8], strides = [1, 1]} : vector<8x96xf32> to vector<8x8xf32>
    %56 = vector.extract_strided_slice %3 {offsets = [0, 88], sizes = [8, 8], strides = [1, 1]} : vector<8x96xf32> to vector<8x8xf32>
    %cst_20 = arith.constant dense<0.000000e+00> : vector<8x8xf32>
    %57 = tpu.matmul %54, %55, %cst_20 {dimension_numbers = #tpu.dot_dimension_numbers<[1], [1], [0], [0], [0, 0, 1, 0], [], []>} : vector<8x8xf32>, vector<8x8xf32>, vector<8x8xf32> -> vector<8x8xf32>
    %cst_21 = arith.constant dense<0xFF800000> : vector<8xf32>
    %58 = vector.multi_reduction <maximumf>, %57, %cst_21 [1] : vector<8x8xf32> to vector<8xf32>
    %59 = vector.shape_cast %58 : vector<8xf32> to vector<8x1xf32>
    %60 = vector.broadcast %59 : vector<8x1xf32> to vector<8x8xf32>
    %61 = arith.subf %57, %60 : vector<8x8xf32>
    %62 = math.exp %61 : vector<8x8xf32>
    %cst_22 = arith.constant dense<0.000000e+00> : vector<8xf32>
    %63 = vector.multi_reduction <add>, %62, %cst_22 [1] : vector<8x8xf32> to vector<8xf32>
    %64 = vector.shape_cast %63 : vector<8xf32> to vector<8x1xf32>
    %65 = vector.broadcast %64 : vector<8x1xf32> to vector<8x8xf32>
    %66 = arith.divf %62, %65 : vector<8x8xf32>
    %cst_23 = arith.constant dense<0.000000e+00> : vector<8x8xf32>
    %67 = tpu.matmul %66, %56, %cst_23 {dimension_numbers = #tpu.dot_dimension_numbers<[1], [0], [0], [1], [0, 0, 1, 1], [], []>} : vector<8x8xf32>, vector<8x8xf32>, vector<8x8xf32> -> vector<8x8xf32>
    %68 = tpu.concatenate %19, %35, %51, %67 in 1 : vector<8x8xf32>, vector<8x8xf32>, vector<8x8xf32>, vector<8x8xf32> -> vector<8x32xf32>
    %c0_24 = arith.constant 0 : index
    %c0_25 = arith.constant 0 : index
    %69 = vector.load %arg3[%c0_24, %c0_25] : memref<32x32xf32, #tpu.memory_space<vmem>>, vector<32x32xf32>
    %cst_26 = arith.constant dense<0.000000e+00> : vector<8x32xf32>
    %70 = tpu.matmul %68, %69, %cst_26 {dimension_numbers = #tpu.dot_dimension_numbers<[1], [0], [0], [1], [0, 0, 1, 1], [], []>} : vector<8x32xf32>, vector<32x32xf32>, vector<8x32xf32> -> vector<8x32xf32>
    %c0_27 = arith.constant 0 : index
    %c0_28 = arith.constant 0 : index
    %71 = vector.load %arg4[%c0_27, %c0_28] : memref<1x32xf32, #tpu.memory_space<vmem>>, vector<1x32xf32>
    %72 = vector.broadcast %71 : vector<1x32xf32> to vector<8x32xf32>
    %73 = arith.addf %70, %72 : vector<8x32xf32>
    %c0_29 = arith.constant 0 : index
    %c0_30 = arith.constant 0 : index
    %c0_31 = arith.constant 0 : index
    %74 = vector.load %arg5[%c0_29, %c0_30, %c0_31] : memref<1x8x32xf32, #tpu.memory_space<vmem>>, vector<1x8x32xf32>
    %75 = vector.shape_cast %74 : vector<1x8x32xf32> to vector<8x32xf32>
    %76 = vector.shape_cast %73 : vector<8x32xf32> to vector<1x8x32xf32>
    tpu.vector_store %arg5[%c0_29, %c0_30, %c0_31], %76 {strides = array<i32>} : memref<1x8x32xf32, #tpu.memory_space<vmem>>, vector<1x8x32xf32>,
    return
  }
  func.func @transform_0(%arg0: i32) -> (i32, i32, i32) {
    %c0_i32 = arith.constant 0 : i32
    %c0_i32_0 = arith.constant 0 : i32
    %c0_i32_1 = arith.constant 0 : i32
    return %arg0, %c0_i32, %c0_i32_0 : i32, i32, i32
  }
  func.func @transform_1(%arg0: i32) -> (i32, i32) {
    %c0_i32 = arith.constant 0 : i32
    %c0_i32_0 = arith.constant 0 : i32
    %c0_i32_1 = arith.constant 0 : i32
    return %c0_i32, %c0_i32_0 : i32, i32
  }
  func.func @transform_2(%arg0: i32) -> (i32, i32) {
    %c0_i32 = arith.constant 0 : i32
    %c0_i32_0 = arith.constant 0 : i32
    %c0_i32_1 = arith.constant 0 : i32
    return %c0_i32, %c0_i32_0 : i32, i32
  }
  func.func @transform_3(%arg0: i32) -> (i32, i32) {
    %c0_i32 = arith.constant 0 : i32
    %c0_i32_0 = arith.constant 0 : i32
    %c0_i32_1 = arith.constant 0 : i32
    return %c0_i32, %c0_i32_0 : i32, i32
  }
  func.func @transform_4(%arg0: i32) -> (i32, i32, i32) {
    %c0_i32 = arith.constant 0 : i32
    %c0_i32_0 = arith.constant 0 : i32
    %c0_i32_1 = arith.constant 0 : i32
    return %arg0, %c0_i32, %c0_i32_0 : i32, i32, i32
  }
}

</mosaic_0001>

<llo_original>
// kernel: tpu_custom_call.1
$region0: #{tpu_custom_call.1}
  #allocation0 [shape = 'u32[]', space=smem, size = 0x4, offset = 0x4, fixed_abs, tag = 'smem constant byte address 0x4 - core index']
  #allocation1 [shape = 'u32[144,128]{1,0:T(1,128)}', space=vmem, size = 0x12000, scoped, tag = 'internal scratch']
  %s0 = inlined_call_operand.hbm [shape: f32[2,8,32], index: 0, kind: input, shape index: {}]
  %s1 = inlined_call_operand.hbm [shape: f32[32,96], index: 1, kind: input, shape index: {}]
  %s2 = inlined_call_operand.hbm [shape: f32[32,32], index: 2, kind: input, shape index: {}]
  %s3 = inlined_call_operand.vmem [shape: f32[1,32], index: 3, kind: input, shape index: {}]
  %s4 = inlined_call_operand.hbm [shape: f32[2,8,32], index: 4, kind: output, shape index: {}]
  %s5 = sld [smem:[#allocation0]]
  $region61: #{tpu_custom_call.1} parent=0
    _
  %s7 = ssub.s32 1, %s5
  %s8 = scalar_select 0, %s7, %s5
  $region1: #{tpu_custom_call.1} parent=0
    #allocation2 [shape = 'u8[8192]{0}', space=vmem, size = 0x2000, scoped, tag = 'input window, operand 0']
    #allocation3 [shape = 's32[2]{0}', space=sflag, size = 0x8, scoped, tag = 'scoped memory for tpu_custom_call.1']
    #allocation4 [shape = 's32[2]{0}', space=sflag, size = 0x8, scoped, tag = 'scoped memory for tpu_custom_call.1']
    #allocation5 [shape = 'u8[16384]{0}', space=vmem, size = 0x4000, scoped, tag = 'input window, operand 1, single buffered']
    #allocation6 [shape = 's32[1]{0}', space=sflag, size = 0x4, scoped, tag = 'scoped memory for tpu_custom_call.1']
    #allocation7 [shape = 'u8[16384]{0}', space=vmem, size = 0x4000, scoped, tag = 'input window, operand 2, single buffered']
    #allocation8 [shape = 'u8[8192]{0}', space=vmem, size = 0x2000, scoped, tag = 'output window, operand 0']
    %9 = vsyncpa [#allocation3], 0
    %s10 = scalar_lea.sflag [#allocation3], 1
    %11 = vsyncpa %s10, 0
    %12 = vsyncpa [#allocation6], 0
    %13 = vsyncpa [#allocation4], 0
    %s14 = scalar_lea.sflag [#allocation4], 1
    %15 = vsyncpa %s14, 0
    loop: start=0, step=1, limit=4
    $region2: #{tpu_custom_call.1} parent=1 // loop_pre_header
      _
    $region3: #{tpu_custom_call.1} parent=1 // loop_header
      %s17 = sphi 0, %s21
      %p18 = scmp.ge.s32.totalorder %s17, 4
      %s27 = sphi 0, %s29
      %s30 = sphi 0, %s27
      %s31 = sphi 0, %s30
      %s47 = sphi 0, %s31
      %s51 = sphi 0, %s51
      %s53 = sphi 0, %s51
      %s54 = sphi 0, %s53
      %s68 = sphi 0, %s54
      %s72 = sphi 0, %s72
      %s74 = sphi 0, %s72
      %s75 = sphi 0, %s74
      %s89 = sphi 0, %s75
      %s93 = sphi 0, %s93
      %s95 = sphi 0, %s93
      %s96 = sphi 0, %s95
      %s110 = sphi 0, %s96
      %s116 = sphi 0, %s118
      %s119 = sphi 0, %s116
      %s120 = sphi 0, %s119
      %s136 = sphi 0, %s120
    $region4: #{tpu_custom_call.1} parent=1 // loop_header_branch
      %20 = sbr.rel (%p18) target = $region8
    $region5: #{tpu_custom_call.1} parent=1 // loop_body
      %s22 = ssub.s32 %s17, 1
      %s23 = ssub.s32 %s17, 2
      %s24 = sadd.s32 %s17, 1
      %s25 = ssub.s32 %s17, %s24
      %p26 = scmp.eq.s32.totalorder %s25, 0
      %s28 = sadd.s32 %s27, 1
      %s29 = scalar_select %p26, %s27, %s28
      %p32 = pneg %p26
      %p33 = scmp.eq.s32.totalorder %s17, 1
      %p34 = por %p32, %p33
      %p35 = scmp.ne.s32.totalorder %s27, %s30
      %p36 = scmp.eq.s32.totalorder %s17, 0
      %p37 = por %p35, %p36
      %p38 = scmp.ne.s32.totalorder %s27, %s30
      %p39 = scmp.eq.s32.totalorder %s22, 1
      %p40 = por %p38, %p39
      %p41 = scmp.ne.s32.totalorder %s30, %s31
      %p42 = scmp.eq.s32.totalorder %s22, 0
      %p43 = por %p41, %p42
      %p44 = scmp.ne.s32.totalorder %s30, %s31
      %p45 = scmp.eq.s32.totalorder %s23, 1
      %p46 = por %p44, %p45
      %p48 = scmp.ne.s32.totalorder %s31, %s47
      %p49 = scmp.eq.s32.totalorder %s23, 0
      %p50 = por %p48, %p49
      %s52 = sadd.s32 %s51, 1
      %p55 = scmp.eq.s32.totalorder %s17, 1
      %p56 = scmp.ne.s32.totalorder %s51, %s53
      %p57 = scmp.eq.s32.totalorder %s17, 0
      %p58 = por %p56, %p57
      %p59 = scmp.ne.s32.totalorder %s51, %s53
      %p60 = scmp.eq.s32.totalorder %s22, 1
      %p61 = por %p59, %p60
      %p62 = scmp.ne.s32.totalorder %s53, %s54
      %p63 = scmp.eq.s32.totalorder %s22, 0
      %p64 = por %p62, %p63
      %p65 = scmp.ne.s32.totalorder %s53, %s54
      %p66 = scmp.eq.s32.totalorder %s23, 1
      %p67 = por %p65, %p66
      %p69 = scmp.ne.s32.totalorder %s54, %s68
      %p70 = scmp.eq.s32.totalorder %s23, 0
      %p71 = por %p69, %p70
      %s73 = sadd.s32 %s72, 1
      %p76 = scmp.eq.s32.totalorder %s17, 1
      %p77 = scmp.ne.s32.totalorder %s72, %s74
      %p78 = scmp.eq.s32.totalorder %s17, 0
      %p79 = por %p77, %p78
      %p80 = scmp.ne.s32.totalorder %s72, %s74
      %p81 = scmp.eq.s32.totalorder %s22, 1
      %p82 = por %p80, %p81
      %p83 = scmp.ne.s32.totalorder %s74, %s75
      %p84 = scmp.eq.s32.totalorder %s22, 0
      %p85 = por %p83, %p84
      %p86 = scmp.ne.s32.totalorder %s74, %s75
      %p87 = scmp.eq.s32.totalorder %s23, 1
      %p88 = por %p86, %p87
      %p90 = scmp.ne.s32.totalorder %s75, %s89
      %p91 = scmp.eq.s32.totalorder %s23, 0
      %p92 = por %p90, %p91
      %s94 = sadd.s32 %s93, 1
      %p97 = scmp.eq.s32.totalorder %s17, 1
      %p98 = scmp.ne.s32.totalorder %s93, %s95
      %p99 = scmp.eq.s32.totalorder %s17, 0
      %p100 = por %p98, %p99
      %p101 = scmp.ne.s32.totalorder %s93, %s95
      %p102 = scmp.eq.s32.totalorder %s22, 1
      %p103 = por %p101, %p102
      %p104 = scmp.ne.s32.totalorder %s95, %s96
      %p105 = scmp.eq.s32.totalorder %s22, 0
      %p106 = por %p104, %p105
      %p107 = scmp.ne.s32.totalorder %s95, %s96
      %p108 = scmp.eq.s32.totalorder %s23, 1
      %p109 = por %p107, %p108
      %p111 = scmp.ne.s32.totalorder %s96, %s110
      %p112 = scmp.eq.s32.totalorder %s23, 0
      %p113 = por %p111, %p112
      %s114 = ssub.s32 %s17, %s24
      %p115 = scmp.eq.s32.totalorder %s114, 0
      %s117 = sadd.s32 %s116, 1
      %s118 = scalar_select %p115, %s116, %s117
      %p121 = pneg %p115
      %p122 = scmp.eq.s32.totalorder %s17, 1
      %p123 = por %p121, %p122
      %p124 = scmp.ne.s32.totalorder %s116, %s119
      %p125 = scmp.eq.s32.totalorder %s17, 0
      %p126 = por %p124, %p125
      %p127 = scmp.ne.s32.totalorder %s116, %s119
      %p128 = scmp.eq.s32.totalorder %s22, 1
      %p129 = por %p127, %p128
      %p130 = scmp.ne.s32.totalorder %s119, %s120
      %p131 = scmp.eq.s32.totalorder %s22, 0
      %p132 = por %p130, %p131
      %p133 = scmp.ne.s32.totalorder %s119, %s120
      %p134 = scmp.eq.s32.totalorder %s23, 1
      %p135 = por %p133, %p134
      %p137 = scmp.ne.s32.totalorder %s120, %s136
      %p138 = scmp.eq.s32.totalorder %s23, 0
      %p139 = por %p137, %p138
      %p140 = scmp.le.s32.totalorder 1, %s17
      %p141 = scmp.lt.s32.totalorder %s17, 3
      %p142 = pnand %p140, %p141
      %p143 = pneg %p142
      // Predicated region
      $region9: #{tpu_custom_call.1} parent=5 // pred_check
        _
      $region10: #{tpu_custom_call.1} parent=5 // pred_check_branch
        %145 = sbr.rel (%p142) target = $region12
      $region11: #{tpu_custom_call.1} parent=5 // pred_region
        %s146 = ssub.s32 %s17, 1
        // Predicated region
        $region13: #{tpu_custom_call.1} parent=11 // pred_check
          %p147 = pneg %p64
        $region14: #{tpu_custom_call.1} parent=11 // pred_check_branch
          %149 = sbr.rel (%p147) target = $region16
        $region15: #{tpu_custom_call.1} parent=11 // pred_region
          %s151 = ssub.s32 512, 512
          %152 = vsyncadd [#allocation6], %s151
          %s153 = sshll.u32 [#allocation5], 4
          %s154 = int_to_ptr.vmem [resolvable:$true] %s153
          %159 = dma.hbm_to_vmem [thread:$0]  %s1, 512, %s154, [#allocation6], 128, 128, 8
        $region16: #{tpu_custom_call.1} parent=11 // pred_fallthru
          _
        // Predicated region
        $region17: #{tpu_custom_call.1} parent=11 // pred_check
          %p160 = pneg %p85
        $region18: #{tpu_custom_call.1} parent=11 // pred_check_branch
          %162 = sbr.rel (%p160) target = $region20
        $region19: #{tpu_custom_call.1} parent=11 // pred_region
          %s164 = ssub.s32 512, 512
          %165 = vsyncadd [#allocation6], %s164
          %s166 = sshll.u32 [#allocation7], 4
          %s167 = int_to_ptr.vmem [resolvable:$true] %s166
          %172 = dma.hbm_to_vmem [thread:$0]  %s2, 512, %s167, [#allocation6], 128, 128, 8
        $region20: #{tpu_custom_call.1} parent=11 // pred_fallthru
          _
        // Predicated region
        $region21: #{tpu_custom_call.1} parent=11 // pred_check
          %p173 = pneg %p106
        $region22: #{tpu_custom_call.1} parent=11 // pred_check_branch
          %175 = sbr.rel (%p173) target = $region24
        $region23: #{tpu_custom_call.1} parent=11 // pred_region
          _
        $region24: #{tpu_custom_call.1} parent=11 // pred_fallthru
          _
      $region12: #{tpu_custom_call.1} parent=5 // pred_fallthru
        _
      %p176 = scmp.lt.s32.totalorder %s17, 2
      // Predicated region
      $region25: #{tpu_custom_call.1} parent=5 // pred_check
        %p177 = pneg %p176
      $region26: #{tpu_custom_call.1} parent=5 // pred_check_branch
        %179 = sbr.rel (%p177) target = $region28
      $region27: #{tpu_custom_call.1} parent=5 // pred_region
        // Predicated region
        $region29: #{tpu_custom_call.1} parent=27 // pred_check
          %p180 = pneg %p37
        $region30: #{tpu_custom_call.1} parent=27 // pred_check_branch
          %182 = sbr.rel (%p180) target = $region32
        $region31: #{tpu_custom_call.1} parent=27 // pred_region
          %s183 = sand.u32 %s27, 1
          %s184 = scalar_lea.sflag [#allocation3], %s183
          %s185 = sand.u32 %s27, 1
          %s186 = smul.addr %s185, 8
          %s187 = scalar_lea.vmem [#allocation2], %s186
          %s189 = ssub.s32 128, 128
          %190 = vsyncadd %s184, %s189
          %s191 = smul.addr %s17, 128
          %s192 = scalar_lea.hbm %s0, %s191
          %s194 = sshll.u32 %s187, 4
          %s195 = int_to_ptr.vmem [resolvable:$true] %s194
          %197 = dma.hbm_to_vmem [thread:$0]  %s192, 128, %s195, %s184
        $region32: #{tpu_custom_call.1} parent=27 // pred_fallthru
          _
      $region28: #{tpu_custom_call.1} parent=5 // pred_fallthru
        _
      %p198 = scmp.le.s32.totalorder 1, %s17
      %p199 = scmp.lt.s32.totalorder %s17, 3
      %p200 = pnand %p198, %p199
      %p201 = pneg %p200
      // Predicated region
      $region33: #{tpu_custom_call.1} parent=5 // pred_check
        _
      $region34: #{tpu_custom_call.1} parent=5 // pred_check_branch
        %203 = sbr.rel (%p200) target = $region36
      $region35: #{tpu_custom_call.1} parent=5 // pred_region
        %s204 = ssub.s32 %s17, 1
        %s205 = sand.u32 %s30, 1
        %s206 = scalar_lea.sflag [#allocation3], %s205
        %s207 = sand.u32 %s30, 1
        %s208 = smul.addr %s207, 8
        %s209 = scalar_lea.vmem [#allocation2], %s208
        // Predicated region
        $region37: #{tpu_custom_call.1} parent=35 // pred_check
          %p210 = pneg %p43
        $region38: #{tpu_custom_call.1} parent=35 // pred_check_branch
          %212 = sbr.rel (%p210) target = $region40
        $region39: #{tpu_custom_call.1} parent=35 // pred_region
          %213 = dma.done %s206, 128
        $region40: #{tpu_custom_call.1} parent=35 // pred_fallthru
          _
        // Predicated region
        $region41: #{tpu_custom_call.1} parent=35 // pred_check
          %p214 = pneg %p64
        $region42: #{tpu_custom_call.1} parent=35 // pred_check_branch
          %216 = sbr.rel (%p214) target = $region44
        $region43: #{tpu_custom_call.1} parent=35 // pred_region
          %217 = dma.done [#allocation6], 512
        $region44: #{tpu_custom_call.1} parent=35 // pred_fallthru
          _
        // Predicated region
        $region45: #{tpu_custom_call.1} parent=35 // pred_check
          %p218 = pneg %p85
        $region46: #{tpu_custom_call.1} parent=35 // pred_check_branch
          %220 = sbr.rel (%p218) target = $region48
        $region47: #{tpu_custom_call.1} parent=35 // pred_region
          %221 = dma.done [#allocation6], 512
        $region48: #{tpu_custom_call.1} parent=35 // pred_fallthru
          _
        %s222 = sand.u32 %s30, 1
        %s223 = scalar_lea.sflag [#allocation3], %s222
        %s224 = sand.u32 %s30, 1
        %s225 = smul.addr %s224, 8
        %s226 = scalar_lea.vmem [#allocation2], %s225
        %p227 = pneg %p43
        %p228 = pneg %p40
        %p229 = pneg %p64
        %p230 = pneg %p61
        %p231 = pneg %p85
        %p232 = pneg %p82
        %p233 = pneg %p106
        %p234 = pneg %p103
        %p235 = pneg %p132
        %p236 = pneg %p129
        %s237 = sand.u32 %s119, 1
        %s238 = scalar_lea.sflag [#allocation4], %s237
        %s239 = sand.u32 %s119, 1
        %s240 = smul.addr %s239, 8
        %s241 = scalar_lea.vmem [#allocation8], %s240
        %v242 = vld [vmem:[%s209] sm:$0xff]
        %v243 = vld [vmem:[#allocation5] sm:$0xff]
        %v244 = vld [vmem:[#allocation5 + $0x8] sm:$0xff]
        %v245 = vld [vmem:[#allocation5 + $0x10] sm:$0xff]
        %v246 = vld [vmem:[#allocation5 + $0x18] sm:$0xff]
        %vm247 = vcmask 261120
        %v249 = vsel %vm247, %v242, 0
        %251 = vmatprep.subr.mxu0 0.0
        %252 = vmatpush1.msra.mxu0 %v243
        %253 = vmatprep.subr.mxu0 0.0
        %254 = vmatpush1.msra.mxu0 %v244
        %255 = vmatprep.subr.mxu0 0.0
        %256 = vmatpush1.msra.mxu0 %v245
        %257 = vmatprep.subr.mxu0 0.0
        %258 = vmatpush1.msra.mxu0 %v246
        %259 = vmatprep.subr.mxu0 0.0
        %260 = vmatpush1.msra.mxu0 0.0
        %261 = vmatprep.subr.mxu0 0.0
        %262 = vmatpush1.msra.mxu0 0.0
        %263 = vmatprep.subr.mxu0 0.0
        %264 = vmatpush1.msra.mxu0 0.0
        %265 = vmatprep.subr.mxu0 0.0
        %266 = vmatpush1.msra.mxu0 0.0
        %267 = vmatprep.subr.mxu0 0.0
        %268 = vmatpush1.msra.mxu0 0.0
        %269 = vmatprep.subr.mxu0 0.0
        %270 = vmatpush1.msra.mxu0 0.0
        %271 = vmatprep.subr.mxu0 0.0
        %272 = vmatpush1.msra.mxu0 0.0
        %273 = vmatprep.subr.mxu0 0.0
        %274 = vmatpush1.msra.mxu0 0.0
        %275 = vmatprep.subr.mxu0 0.0
        %276 = vmatpush1.msra.mxu0 0.0
        %277 = vmatprep.subr.mxu0 0.0
        %278 = vmatpush1.msra.mxu0 0.0
        %279 = vmatprep.subr.mxu0 0.0
        %280 = vmatpush1.msra.mxu0 0.0
        %281 = vmatprep.subr.mxu0 0.0
        %282 = vmatpush1.msra.mxu0 0.0
        %283 = vmatprep.subr.mxu0 0.0
        %284 = vmatpush1.msra.mxu0 0.0
        %285 = vmatprep.subr.mxu0 0.0
        %286 = vmatpush1.msra.mxu0 0.0
        %287 = vmatprep.subr.mxu0 0.0
        %288 = vmatpush1.msra.mxu0 0.0
        %289 = vmatprep.subr.mxu0 0.0
        %290 = vmatpush1.msra.mxu0 0.0
        %291 = vmatprep.subr.mxu0 0.0
        %292 = vmatpush1.msra.mxu0 0.0
        %293 = vmatprep.subr.mxu0 0.0
        %294 = vmatpush1.msra.mxu0 0.0
        %295 = vmatprep.subr.mxu0 0.0
        %296 = vmatpush1.msra.mxu0 0.0
        %297 = vmatprep.subr.mxu0 0.0
        %298 = vmatpush1.msra.mxu0 0.0
        %299 = vmatprep.subr.mxu0 0.0
        %300 = vmatpush1.msra.mxu0 0.0
        %301 = vmatprep.subr.mxu0 0.0
        %302 = vmatpush1.msra.mxu0 0.0
        %303 = vmatprep.subr.mxu0 0.0
        %304 = vmatpush1.msra.mxu0 0.0
        %305 = vmatprep.subr.mxu0 0.0
        %306 = vmatpush1.msra.mxu0 0.0
        %307 = vmatprep.subr.mxu0 0.0
        %308 = vmatpush1.msra.mxu0 0.0
        %309 = vmatprep.subr.mxu0 0.0
        %310 = vmatpush1.msra.mxu0 0.0
        %311 = vmatprep.subr.mxu0 0.0
        %312 = vmatpush1.msra.mxu0 0.0
        %313 = vmatprep.subr.mxu0 0.0
        %314 = vmatpush1.msra.mxu0 0.0
        %315 = vmatprep.mubr.f32.mxu0 0.0
        %316 = vmatmul.mubr.f32.gmra.mrb[0].mxu0 %v249
        %v317 = vpop.f32.mrb[0].mxu0
        %v318 = vadd.f32 0.0, %v317
        %v319 = vpop.f32.mrb[0].mxu0
        %320 = vdwg.mxu0
        %v321 = vmul.f32 %v318, 0.35355338
        %323 = vrot.lane.b32.xlu0 %v318, 96
        %v324 = vpop.permute.xlu0 %323
        %vm325 = vcmask 64512
        %v327 = vsel %vm325, %v321, 0
        %v329 = vsel %vm325, %v324, 0
        %331 = vmatprep.subr.mxu0 0.0
        %332 = vmatpush1.xpose.msra.mxu0 %v329
        %333 = vmatprep.subr.mxu0 0.0
        %334 = vmatpush1.xpose.msra.mxu0 0.0
        %335 = vmatprep.subr.mxu0 0.0
        %336 = vmatpush1.xpose.msra.mxu0 0.0
        %337 = vmatprep.subr.mxu0 0.0
        %338 = vmatpush1.xpose.msra.mxu0 0.0
        %339 = vmatprep.subr.mxu0 0.0
        %340 = vmatpush1.xpose.msra.mxu0 0.0
        %341 = vmatprep.subr.mxu0 0.0
        %342 = vmatpush1.xpose.msra.mxu0 0.0
        %343 = vmatprep.subr.mxu0 0.0
        %344 = vmatpush1.xpose.msra.mxu0 0.0
        %345 = vmatprep.subr.mxu0 0.0
        %346 = vmatpush1.xpose.msra.mxu0 0.0
        %347 = vmatprep.subr.mxu0 0.0
        %348 = vmatpush1.xpose.msra.mxu0 0.0
        %349 = vmatprep.subr.mxu0 0.0
        %350 = vmatpush1.xpose.msra.mxu0 0.0
        %351 = vmatprep.subr.mxu0 0.0
        %352 = vmatpush1.xpose.msra.mxu0 0.0
        %353 = vmatprep.subr.mxu0 0.0
        %354 = vmatpush1.xpose.msra.mxu0 0.0
        %355 = vmatprep.subr.mxu0 0.0
        %356 = vmatpush1.xpose.msra.mxu0 0.0
        %357 = vmatprep.subr.mxu0 0.0
        %358 = vmatpush1.xpose.msra.mxu0 0.0
        %359 = vmatprep.subr.mxu0 0.0
        %360 = vmatpush1.xpose.msra.mxu0 0.0
        %361 = vmatprep.subr.mxu0 0.0
        %362 = vmatpush1.xpose.msra.mxu0 0.0
        %363 = vmatprep.subr.mxu0 0.0
        %364 = vmatpush1.xpose.msra.mxu0 0.0
        %365 = vmatprep.subr.mxu0 0.0
        %366 = vmatpush1.xpose.msra.mxu0 0.0
        %367 = vmatprep.subr.mxu0 0.0
        %368 = vmatpush1.xpose.msra.mxu0 0.0
        %369 = vmatprep.subr.mxu0 0.0
        %370 = vmatpush1.xpose.msra.mxu0 0.0
        %371 = vmatprep.subr.mxu0 0.0
        %372 = vmatpush1.xpose.msra.mxu0 0.0
        %373 = vmatprep.subr.mxu0 0.0
        %374 = vmatpush1.xpose.msra.mxu0 0.0
        %375 = vmatprep.subr.mxu0 0.0
        %376 = vmatpush1.xpose.msra.mxu0 0.0
        %377 = vmatprep.subr.mxu0 0.0
        %378 = vmatpush1.xpose.msra.mxu0 0.0
        %379 = vmatprep.subr.mxu0 0.0
        %380 = vmatpush1.xpose.msra.mxu0 0.0
        %381 = vmatprep.subr.mxu0 0.0
        %382 = vmatpush1.xpose.msra.mxu0 0.0
        %383 = vmatprep.subr.mxu0 0.0
        %384 = vmatpush1.xpose.msra.mxu0 0.0
        %385 = vmatprep.subr.mxu0 0.0
        %386 = vmatpush1.xpose.msra.mxu0 0.0
        %387 = vmatprep.subr.mxu0 0.0
        %388 = vmatpush1.xpose.msra.mxu0 0.0
        %389 = vmatprep.subr.mxu0 0.0
        %390 = vmatpush1.xpose.msra.mxu0 0.0
        %391 = vmatprep.subr.mxu0 0.0
        %392 = vmatpush1.xpose.msra.mxu0 0.0
        %393 = vmatprep.subr.mxu0 0.0
        %394 = vmatpush1.xpose.msra.mxu0 0.0
        %395 = vmatprep.mubr.f32.mxu0 0.0
        %396 = vmatmul.mubr.f32.gmra.mrb[0].mxu0 %v327
        %v397 = vpop.f32.mrb[0].mxu0
        %v398 = vadd.f32 0.0, %v397
        %v399 = vpop.f32.mrb[0].mxu0
        %400 = vdwg.mxu0
        %v401 = vsel %vm325, %v398, -inf
        %402 = vmax.xlane.f32.xlu0 %v401
        %v403 = vpop.xlane.xlu0 %402
        %v404 = vsub.f32 %v398, %v403
        %v405 = vmul.f32 %v404, 1.442695
        %v406 = vpow.pop %v405
        %v407 = vsel %vm325, %v406, 0.0
        %408 = vadd.xlane.f32.xlu0 %v407
        %v409 = vpop.xlane.xlu0 %408
        %v410 = vrcp.pop %v409
        %v411 = vmul.f32 %v406, %v410
        %412 = vrot.lane.b32.xlu0 %v318, 64
        %v413 = vpop.permute.xlu0 %412
        %v416 = vsel %vm325, %v411, 0
        %418 = vmatprep.subr.mxu0 0.0
        %419 = vmatpush1.msra.mxu0 %v413
        %420 = vmatprep.subr.mxu0 0.0
        %421 = vmatpush1.msra.mxu0 0.0
        %422 = vmatprep.subr.mxu0 0.0
        %423 = vmatpush1.msra.mxu0 0.0
        %424 = vmatprep.subr.mxu0 0.0
        %425 = vmatpush1.msra.mxu0 0.0
        %426 = vmatprep.subr.mxu0 0.0
        %427 = vmatpush1.msra.mxu0 0.0
        %428 = vmatprep.subr.mxu0 0.0
        %429 = vmatpush1.msra.mxu0 0.0
        %430 = vmatprep.subr.mxu0 0.0
        %431 = vmatpush1.msra.mxu0 0.0
        %432 = vmatprep.subr.mxu0 0.0
        %433 = vmatpush1.msra.mxu0 0.0
        %434 = vmatprep.subr.mxu0 0.0
        %435 = vmatpush1.msra.mxu0 0.0
        %436 = vmatprep.subr.mxu0 0.0
        %437 = vmatpush1.msra.mxu0 0.0
        %438 = vmatprep.subr.mxu0 0.0
        %439 = vmatpush1.msra.mxu0 0.0
        %440 = vmatprep.subr.mxu0 0.0
        %441 = vmatpush1.msra.mxu0 0.0
        %442 = vmatprep.subr.mxu0 0.0
        %443 = vmatpush1.msra.mxu0 0.0
        %444 = vmatprep.subr.mxu0 0.0
        %445 = vmatpush1.msra.mxu0 0.0
        %446 = vmatprep.subr.mxu0 0.0
        %447 = vmatpush1.msra.mxu0 0.0
        %448 = vmatprep.subr.mxu0 0.0
        %449 = vmatpush1.msra.mxu0 0.0
        %450 = vmatprep.subr.mxu0 0.0
        %451 = vmatpush1.msra.mxu0 0.0
        %452 = vmatprep.subr.mxu0 0.0
        %453 = vmatpush1.msra.mxu0 0.0
        %454 = vmatprep.subr.mxu0 0.0
        %455 = vmatpush1.msra.mxu0 0.0
        %456 = vmatprep.subr.mxu0 0.0
        %457 = vmatpush1.msra.mxu0 0.0
        %458 = vmatprep.subr.mxu0 0.0
        %459 = vmatpush1.msra.mxu0 0.0
        %460 = vmatprep.subr.mxu0 0.0
        %461 = vmatpush1.msra.mxu0 0.0
        %462 = vmatprep.subr.mxu0 0.0
        %463 = vmatpush1.msra.mxu0 0.0
        %464 = vmatprep.subr.mxu0 0.0
        %465 = vmatpush1.msra.mxu0 0.0
        %466 = vmatprep.subr.mxu0 0.0
        %467 = vmatpush1.msra.mxu0 0.0
        %468 = vmatprep.subr.mxu0 0.0
        %469 = vmatpush1.msra.mxu0 0.0
        %470 = vmatprep.subr.mxu0 0.0
        %471 = vmatpush1.msra.mxu0 0.0
        %472 = vmatprep.subr.mxu0 0.0
        %473 = vmatpush1.msra.mxu0 0.0
        %474 = vmatprep.subr.mxu0 0.0
        %475 = vmatpush1.msra.mxu0 0.0
        %476 = vmatprep.subr.mxu0 0.0
        %477 = vmatpush1.msra.mxu0 0.0
        %478 = vmatprep.subr.mxu0 0.0
        %479 = vmatpush1.msra.mxu0 0.0
        %480 = vmatprep.subr.mxu0 0.0
        %481 = vmatpush1.msra.mxu0 0.0
        %482 = vmatprep.mubr.f32.mxu0 0.0
        %483 = vmatmul.mubr.f32.gmra.mrb[0].mxu0 %v416
        %v484 = vpop.f32.mrb[0].mxu0
        %v485 = vadd.f32 0.0, %v484
        %v486 = vpop.f32.mrb[0].mxu0
        %487 = vdwg.mxu0
        %488 = vrot.lane.b32.xlu0 %v321, 120
        %v489 = vpop.permute.xlu0 %488
        %490 = vrot.lane.b32.xlu0 %v318, 88
        %v491 = vpop.permute.xlu0 %490
        %v492 = vsel %vm325, %v489, 0
        %v494 = vsel %vm325, %v491, 0
        %496 = vmatprep.subr.mxu0 0.0
        %497 = vmatpush1.xpose.msra.mxu0 %v494
        %498 = vmatprep.subr.mxu0 0.0
        %499 = vmatpush1.xpose.msra.mxu0 0.0
        %500 = vmatprep.subr.mxu0 0.0
        %501 = vmatpush1.xpose.msra.mxu0 0.0
        %502 = vmatprep.subr.mxu0 0.0
        %503 = vmatpush1.xpose.msra.mxu0 0.0
        %504 = vmatprep.subr.mxu0 0.0
        %505 = vmatpush1.xpose.msra.mxu0 0.0
        %506 = vmatprep.subr.mxu0 0.0
        %507 = vmatpush1.xpose.msra.mxu0 0.0
        %508 = vmatprep.subr.mxu0 0.0
        %509 = vmatpush1.xpose.msra.mxu0 0.0
        %510 = vmatprep.subr.mxu0 0.0
        %511 = vmatpush1.xpose.msra.mxu0 0.0
        %512 = vmatprep.subr.mxu0 0.0
        %513 = vmatpush1.xpose.msra.mxu0 0.0
        %514 = vmatprep.subr.mxu0 0.0
        %515 = vmatpush1.xpose.msra.mxu0 0.0
        %516 = vmatprep.subr.mxu0 0.0
        %517 = vmatpush1.xpose.msra.mxu0 0.0
        %518 = vmatprep.subr.mxu0 0.0
        %519 = vmatpush1.xpose.msra.mxu0 0.0
        %520 = vmatprep.subr.mxu0 0.0
        %521 = vmatpush1.xpose.msra.mxu0 0.0
        %522 = vmatprep.subr.mxu0 0.0
        %523 = vmatpush1.xpose.msra.mxu0 0.0
        %524 = vmatprep.subr.mxu0 0.0
        %525 = vmatpush1.xpose.msra.mxu0 0.0
        %526 = vmatprep.subr.mxu0 0.0
        %527 = vmatpush1.xpose.msra.mxu0 0.0
        %528 = vmatprep.subr.mxu0 0.0
        %529 = vmatpush1.xpose.msra.mxu0 0.0
        %530 = vmatprep.subr.mxu0 0.0
        %531 = vmatpush1.xpose.msra.mxu0 0.0
        %532 = vmatprep.subr.mxu0 0.0
        %533 = vmatpush1.xpose.msra.mxu0 0.0
        %534 = vmatprep.subr.mxu0 0.0
        %535 = vmatpush1.xpose.msra.mxu0 0.0
        %536 = vmatprep.subr.mxu0 0.0
        %537 = vmatpush1.xpose.msra.mxu0 0.0
        %538 = vmatprep.subr.mxu0 0.0
        %539 = vmatpush1.xpose.msra.mxu0 0.0
        %540 = vmatprep.subr.mxu0 0.0
        %541 = vmatpush1.xpose.msra.mxu0 0.0
        %542 = vmatprep.subr.mxu0 0.0
        %543 = vmatpush1.xpose.msra.mxu0 0.0
        %544 = vmatprep.subr.mxu0 0.0
        %545 = vmatpush1.xpose.msra.mxu0 0.0
        %546 = vmatprep.subr.mxu0 0.0
        %547 = vmatpush1.xpose.msra.mxu0 0.0
        %548 = vmatprep.subr.mxu0 0.0
        %549 = vmatpush1.xpose.msra.mxu0 0.0
        %550 = vmatprep.subr.mxu0 0.0
        %551 = vmatpush1.xpose.msra.mxu0 0.0
        %552 = vmatprep.subr.mxu0 0.0
        %553 = vmatpush1.xpose.msra.mxu0 0.0
        %554 = vmatprep.subr.mxu0 0.0
        %555 = vmatpush1.xpose.msra.mxu0 0.0
        %556 = vmatprep.subr.mxu0 0.0
        %557 = vmatpush1.xpose.msra.mxu0 0.0
        %558 = vmatprep.subr.mxu0 0.0
        %559 = vmatpush1.xpose.msra.mxu0 0.0
        %560 = vmatprep.mubr.f32.mxu0 0.0
        %561 = vmatmul.mubr.f32.gmra.mrb[0].mxu0 %v492
        %v562 = vpop.f32.mrb[0].mxu0
        %v563 = vadd.f32 0.0, %v562
        %v564 = vpop.f32.mrb[0].mxu0
        %565 = vdwg.mxu0
        %v566 = vsel %vm325, %v563, -inf
        %567 = vmax.xlane.f32.xlu0 %v566
        %v568 = vpop.xlane.xlu0 %567
        %v569 = vsub.f32 %v563, %v568
        %v570 = vmul.f32 %v569, 1.442695
        %v571 = vpow.pop %v570
        %v572 = vsel %vm325, %v571, 0.0
        %573 = vadd.xlane.f32.xlu0 %v572
        %v574 = vpop.xlane.xlu0 %573
        %v575 = vrcp.pop %v574
        %v576 = vmul.f32 %v571, %v575
        %577 = vrot.lane.b32.xlu0 %v318, 56
        %v578 = vpop.permute.xlu0 %577
        %v581 = vsel %vm325, %v576, 0
        %583 = vmatprep.subr.mxu0 0.0
        %584 = vmatpush1.msra.mxu0 %v578
        %585 = vmatprep.subr.mxu0 0.0
        %586 = vmatpush1.msra.mxu0 0.0
        %587 = vmatprep.subr.mxu0 0.0
        %588 = vmatpush1.msra.mxu0 0.0
        %589 = vmatprep.subr.mxu0 0.0
        %590 = vmatpush1.msra.mxu0 0.0
        %591 = vmatprep.subr.mxu0 0.0
        %592 = vmatpush1.msra.mxu0 0.0
        %593 = vmatprep.subr.mxu0 0.0
        %594 = vmatpush1.msra.mxu0 0.0
        %595 = vmatprep.subr.mxu0 0.0
        %596 = vmatpush1.msra.mxu0 0.0
        %597 = vmatprep.subr.mxu0 0.0
        %598 = vmatpush1.msra.mxu0 0.0
        %599 = vmatprep.subr.mxu0 0.0
        %600 = vmatpush1.msra.mxu0 0.0
        %601 = vmatprep.subr.mxu0 0.0
        %602 = vmatpush1.msra.mxu0 0.0
        %603 = vmatprep.subr.mxu0 0.0
        %604 = vmatpush1.msra.mxu0 0.0
        %605 = vmatprep.subr.mxu0 0.0
        %606 = vmatpush1.msra.mxu0 0.0
        %607 = vmatprep.subr.mxu0 0.0
        %608 = vmatpush1.msra.mxu0 0.0
        %609 = vmatprep.subr.mxu0 0.0
        %610 = vmatpush1.msra.mxu0 0.0
        %611 = vmatprep.subr.mxu0 0.0
        %612 = vmatpush1.msra.mxu0 0.0
        %613 = vmatprep.subr.mxu0 0.0
        %614 = vmatpush1.msra.mxu0 0.0
        %615 = vmatprep.subr.mxu0 0.0
        %616 = vmatpush1.msra.mxu0 0.0
        %617 = vmatprep.subr.mxu0 0.0
        %618 = vmatpush1.msra.mxu0 0.0
        %619 = vmatprep.subr.mxu0 0.0
        %620 = vmatpush1.msra.mxu0 0.0
        %621 = vmatprep.subr.mxu0 0.0
        %622 = vmatpush1.msra.mxu0 0.0
        %623 = vmatprep.subr.mxu0 0.0
        %624 = vmatpush1.msra.mxu0 0.0
        %625 = vmatprep.subr.mxu0 0.0
        %626 = vmatpush1.msra.mxu0 0.0
        %627 = vmatprep.subr.mxu0 0.0
        %628 = vmatpush1.msra.mxu0 0.0
        %629 = vmatprep.subr.mxu0 0.0
        %630 = vmatpush1.msra.mxu0 0.0
        %631 = vmatprep.subr.mxu0 0.0
        %632 = vmatpush1.msra.mxu0 0.0
        %633 = vmatprep.subr.mxu0 0.0
        %634 = vmatpush1.msra.mxu0 0.0
        %635 = vmatprep.subr.mxu0 0.0
        %636 = vmatpush1.msra.mxu0 0.0
        %637 = vmatprep.subr.mxu0 0.0
        %638 = vmatpush1.msra.mxu0 0.0
        %639 = vmatprep.subr.mxu0 0.0
        %640 = vmatpush1.msra.mxu0 0.0
        %641 = vmatprep.subr.mxu0 0.0
        %642 = vmatpush1.msra.mxu0 0.0
        %643 = vmatprep.subr.mxu0 0.0
        %644 = vmatpush1.msra.mxu0 0.0
        %645 = vmatprep.subr.mxu0 0.0
        %646 = vmatpush1.msra.mxu0 0.0
        %647 = vmatprep.mubr.f32.mxu0 0.0
        %648 = vmatmul.mubr.f32.gmra.mrb[0].mxu0 %v581
        %v649 = vpop.f32.mrb[0].mxu0
        %v650 = vadd.f32 0.0, %v649
        %v651 = vpop.f32.mrb[0].mxu0
        %652 = vdwg.mxu0
        %653 = vrot.lane.b32.xlu0 %v321, 112
        %v654 = vpop.permute.xlu0 %653
        %655 = vrot.lane.b32.xlu0 %v318, 80
        %v656 = vpop.permute.xlu0 %655
        %v657 = vsel %vm325, %v654, 0
        %v659 = vsel %vm325, %v656, 0
        %661 = vmatprep.subr.mxu0 0.0
        %662 = vmatpush1.xpose.msra.mxu0 %v659
        %663 = vmatprep.subr.mxu0 0.0
        %664 = vmatpush1.xpose.msra.mxu0 0.0
        %665 = vmatprep.subr.mxu0 0.0
        %666 = vmatpush1.xpose.msra.mxu0 0.0
        %667 = vmatprep.subr.mxu0 0.0
        %668 = vmatpush1.xpose.msra.mxu0 0.0
        %669 = vmatprep.subr.mxu0 0.0
        %670 = vmatpush1.xpose.msra.mxu0 0.0
        %671 = vmatprep.subr.mxu0 0.0
        %672 = vmatpush1.xpose.msra.mxu0 0.0
        %673 = vmatprep.subr.mxu0 0.0
        %674 = vmatpush1.xpose.msra.mxu0 0.0
        %675 = vmatprep.subr.mxu0 0.0
        %676 = vmatpush1.xpose.msra.mxu0 0.0
        %677 = vmatprep.subr.mxu0 0.0
        %678 = vmatpush1.xpose.msra.mxu0 0.0
        %679 = vmatprep.subr.mxu0 0.0
        %680 = vmatpush1.xpose.msra.mxu0 0.0
        %681 = vmatprep.subr.mxu0 0.0
        %682 = vmatpush1.xpose.msra.mxu0 0.0
        %683 = vmatprep.subr.mxu0 0.0
        %684 = vmatpush1.xpose.msra.mxu0 0.0
        %685 = vmatprep.subr.mxu0 0.0
        %686 = vmatpush1.xpose.msra.mxu0 0.0
        %687 = vmatprep.subr.mxu0 0.0
        %688 = vmatpush1.xpose.msra.mxu0 0.0
        %689 = vmatprep.subr.mxu0 0.0
        %690 = vmatpush1.xpose.msra.mxu0 0.0
        %691 = vmatprep.subr.mxu0 0.0
        %692 = vmatpush1.xpose.msra.mxu0 0.0
        %693 = vmatprep.subr.mxu0 0.0
        %694 = vmatpush1.xpose.msra.mxu0 0.0
        %695 = vmatprep.subr.mxu0 0.0
        %696 = vmatpush1.xpose.msra.mxu0 0.0
        %697 = vmatprep.subr.mxu0 0.0
        %698 = vmatpush1.xpose.msra.mxu0 0.0
        %699 = vmatprep.subr.mxu0 0.0
        %700 = vmatpush1.xpose.msra.mxu0 0.0
        %701 = vmatprep.subr.mxu0 0.0
        %702 = vmatpush1.xpose.msra.mxu0 0.0
        %703 = vmatprep.subr.mxu0 0.0
        %704 = vmatpush1.xpose.msra.mxu0 0.0
        %705 = vmatprep.subr.mxu0 0.0
        %706 = vmatpush1.xpose.msra.mxu0 0.0
        %707 = vmatprep.subr.mxu0 0.0
        %708 = vmatpush1.xpose.msra.mxu0 0.0
        %709 = vmatprep.subr.mxu0 0.0
        %710 = vmatpush1.xpose.msra.mxu0 0.0
        %711 = vmatprep.subr.mxu0 0.0
        %712 = vmatpush1.xpose.msra.mxu0 0.0
        %713 = vmatprep.subr.mxu0 0.0
        %714 = vmatpush1.xpose.msra.mxu0 0.0
        %715 = vmatprep.subr.mxu0 0.0
        %716 = vmatpush1.xpose.msra.mxu0 0.0
        %717 = vmatprep.subr.mxu0 0.0
        %718 = vmatpush1.xpose.msra.mxu0 0.0
        %719 = vmatprep.subr.mxu0 0.0
        %720 = vmatpush1.xpose.msra.mxu0 0.0
        %721 = vmatprep.subr.mxu0 0.0
        %722 = vmatpush1.xpose.msra.mxu0 0.0
        %723 = vmatprep.subr.mxu0 0.0
        %724 = vmatpush1.xpose.msra.mxu0 0.0
        %725 = vmatprep.mubr.f32.mxu0 0.0
        %726 = vmatmul.mubr.f32.gmra.mrb[0].mxu0 %v657
        %v727 = vpop.f32.mrb[0].mxu0
        %v728 = vadd.f32 0.0, %v727
        %v729 = vpop.f32.mrb[0].mxu0
        %730 = vdwg.mxu0
        %v731 = vsel %vm325, %v728, -inf
        %732 = vmax.xlane.f32.xlu0 %v731
        %v733 = vpop.xlane.xlu0 %732
        %v734 = vsub.f32 %v728, %v733
        %v735 = vmul.f32 %v734, 1.442695
        %v736 = vpow.pop %v735
        %v737 = vsel %vm325, %v736, 0.0
        %738 = vadd.xlane.f32.xlu0 %v737
        %v739 = vpop.xlane.xlu0 %738
        %v740 = vrcp.pop %v739
        %v741 = vmul.f32 %v736, %v740
        %742 = vrot.lane.b32.xlu0 %v318, 48
        %v743 = vpop.permute.xlu0 %742
        %v746 = vsel %vm325, %v741, 0
        %748 = vmatprep.subr.mxu0 0.0
        %749 = vmatpush1.msra.mxu0 %v743
        %750 = vmatprep.subr.mxu0 0.0
        %751 = vmatpush1.msra.mxu0 0.0
        %752 = vmatprep.subr.mxu0 0.0
        %753 = vmatpush1.msra.mxu0 0.0
        %754 = vmatprep.subr.mxu0 0.0
        %755 = vmatpush1.msra.mxu0 0.0
        %756 = vmatprep.subr.mxu0 0.0
        %757 = vmatpush1.msra.mxu0 0.0
        %758 = vmatprep.subr.mxu0 0.0
        %759 = vmatpush1.msra.mxu0 0.0
        %760 = vmatprep.subr.mxu0 0.0
        %761 = vmatpush1.msra.mxu0 0.0
        %762 = vmatprep.subr.mxu0 0.0
        %763 = vmatpush1.msra.mxu0 0.0
        %764 = vmatprep.subr.mxu0 0.0
        %765 = vmatpush1.msra.mxu0 0.0
        %766 = vmatprep.subr.mxu0 0.0
        %767 = vmatpush1.msra.mxu0 0.0
        %768 = vmatprep.subr.mxu0 0.0
        %769 = vmatpush1.msra.mxu0 0.0
        %770 = vmatprep.subr.mxu0 0.0
        %771 = vmatpush1.msra.mxu0 0.0
        %772 = vmatprep.subr.mxu0 0.0
        %773 = vmatpush1.msra.mxu0 0.0
        %774 = vmatprep.subr.mxu0 0.0
        %775 = vmatpush1.msra.mxu0 0.0
        %776 = vmatprep.subr.mxu0 0.0
        %777 = vmatpush1.msra.mxu0 0.0
        %778 = vmatprep.subr.mxu0 0.0
        %779 = vmatpush1.msra.mxu0 0.0
        %780 = vmatprep.subr.mxu0 0.0
        %781 = vmatpush1.msra.mxu0 0.0
        %782 = vmatprep.subr.mxu0 0.0
        %783 = vmatpush1.msra.mxu0 0.0
        %784 = vmatprep.subr.mxu0 0.0
        %785 = vmatpush1.msra.mxu0 0.0
        %786 = vmatprep.subr.mxu0 0.0
        %787 = vmatpush1.msra.mxu0 0.0
        %788 = vmatprep.subr.mxu0 0.0
        %789 = vmatpush1.msra.mxu0 0.0
        %790 = vmatprep.subr.mxu0 0.0
        %791 = vmatpush1.msra.mxu0 0.0
        %792 = vmatprep.subr.mxu0 0.0
        %793 = vmatpush1.msra.mxu0 0.0
        %794 = vmatprep.subr.mxu0 0.0
        %795 = vmatpush1.msra.mxu0 0.0
        %796 = vmatprep.subr.mxu0 0.0
        %797 = vmatpush1.msra.mxu0 0.0
        %798 = vmatprep.subr.mxu0 0.0
        %799 = vmatpush1.msra.mxu0 0.0
        %800 = vmatprep.subr.mxu0 0.0
        %801 = vmatpush1.msra.mxu0 0.0
        %802 = vmatprep.subr.mxu0 0.0
        %803 = vmatpush1.msra.mxu0 0.0
        %804 = vmatprep.subr.mxu0 0.0
        %805 = vmatpush1.msra.mxu0 0.0
        %806 = vmatprep.subr.mxu0 0.0
        %807 = vmatpush1.msra.mxu0 0.0
        %808 = vmatprep.subr.mxu0 0.0
        %809 = vmatpush1.msra.mxu0 0.0
        %810 = vmatprep.subr.mxu0 0.0
        %811 = vmatpush1.msra.mxu0 0.0
        %812 = vmatprep.mubr.f32.mxu0 0.0
        %813 = vmatmul.mubr.f32.gmra.mrb[0].mxu0 %v746
        %v814 = vpop.f32.mrb[0].mxu0
        %v815 = vadd.f32 0.0, %v814
        %v816 = vpop.f32.mrb[0].mxu0
        %817 = vdwg.mxu0
        %818 = vrot.lane.b32.xlu0 %v321, 104
        %v819 = vpop.permute.xlu0 %818
        %820 = vrot.lane.b32.xlu0 %v318, 72
        %v821 = vpop.permute.xlu0 %820
        %v822 = vsel %vm325, %v819, 0
        %v824 = vsel %vm325, %v821, 0
        %826 = vmatprep.subr.mxu0 0.0
        %827 = vmatpush1.xpose.msra.mxu0 %v824
        %828 = vmatprep.subr.mxu0 0.0
        %829 = vmatpush1.xpose.msra.mxu0 0.0
        %830 = vmatprep.subr.mxu0 0.0
        %831 = vmatpush1.xpose.msra.mxu0 0.0
        %832 = vmatprep.subr.mxu0 0.0
        %833 = vmatpush1.xpose.msra.mxu0 0.0
        %834 = vmatprep.subr.mxu0 0.0
        %835 = vmatpush1.xpose.msra.mxu0 0.0
        %836 = vmatprep.subr.mxu0 0.0
        %837 = vmatpush1.xpose.msra.mxu0 0.0
        %838 = vmatprep.subr.mxu0 0.0
        %839 = vmatpush1.xpose.msra.mxu0 0.0
        %840 = vmatprep.subr.mxu0 0.0
        %841 = vmatpush1.xpose.msra.mxu0 0.0
        %842 = vmatprep.subr.mxu0 0.0
        %843 = vmatpush1.xpose.msra.mxu0 0.0
        %844 = vmatprep.subr.mxu0 0.0
        %845 = vmatpush1.xpose.msra.mxu0 0.0
        %846 = vmatprep.subr.mxu0 0.0
        %847 = vmatpush1.xpose.msra.mxu0 0.0
        %848 = vmatprep.subr.mxu0 0.0
        %849 = vmatpush1.xpose.msra.mxu0 0.0
        %850 = vmatprep.subr.mxu0 0.0
        %851 = vmatpush1.xpose.msra.mxu0 0.0
        %852 = vmatprep.subr.mxu0 0.0
        %853 = vmatpush1.xpose.msra.mxu0 0.0
        %854 = vmatprep.subr.mxu0 0.0
        %855 = vmatpush1.xpose.msra.mxu0 0.0
        %856 = vmatprep.subr.mxu0 0.0
        %857 = vmatpush1.xpose.msra.mxu0 0.0
        %858 = vmatprep.subr.mxu0 0.0
        %859 = vmatpush1.xpose.msra.mxu0 0.0
        %860 = vmatprep.subr.mxu0 0.0
        %861 = vmatpush1.xpose.msra.mxu0 0.0
        %862 = vmatprep.subr.mxu0 0.0
        %863 = vmatpush1.xpose.msra.mxu0 0.0
        %864 = vmatprep.subr.mxu0 0.0
        %865 = vmatpush1.xpose.msra.mxu0 0.0
        %866 = vmatprep.subr.mxu0 0.0
        %867 = vmatpush1.xpose.msra.mxu0 0.0
        %868 = vmatprep.subr.mxu0 0.0
        %869 = vmatpush1.xpose.msra.mxu0 0.0
        %870 = vmatprep.subr.mxu0 0.0
        %871 = vmatpush1.xpose.msra.mxu0 0.0
        %872 = vmatprep.subr.mxu0 0.0
        %873 = vmatpush1.xpose.msra.mxu0 0.0
        %874 = vmatprep.subr.mxu0 0.0
        %875 = vmatpush1.xpose.msra.mxu0 0.0
        %876 = vmatprep.subr.mxu0 0.0
        %877 = vmatpush1.xpose.msra.mxu0 0.0
        %878 = vmatprep.subr.mxu0 0.0
        %879 = vmatpush1.xpose.msra.mxu0 0.0
        %880 = vmatprep.subr.mxu0 0.0
        %881 = vmatpush1.xpose.msra.mxu0 0.0
        %882 = vmatprep.subr.mxu0 0.0
        %883 = vmatpush1.xpose.msra.mxu0 0.0
        %884 = vmatprep.subr.mxu0 0.0
        %885 = vmatpush1.xpose.msra.mxu0 0.0
        %886 = vmatprep.subr.mxu0 0.0
        %887 = vmatpush1.xpose.msra.mxu0 0.0
        %888 = vmatprep.subr.mxu0 0.0
        %889 = vmatpush1.xpose.msra.mxu0 0.0
        %890 = vmatprep.mubr.f32.mxu0 0.0
        %891 = vmatmul.mubr.f32.gmra.mrb[0].mxu0 %v822
        %v892 = vpop.f32.mrb[0].mxu0
        %v893 = vadd.f32 0.0, %v892
        %v894 = vpop.f32.mrb[0].mxu0
        %895 = vdwg.mxu0
        %v896 = vsel %vm325, %v893, -inf
        %897 = vmax.xlane.f32.xlu0 %v896
        %v898 = vpop.xlane.xlu0 %897
        %v899 = vsub.f32 %v893, %v898
        %v900 = vmul.f32 %v899, 1.442695
        %v901 = vpow.pop %v900
        %v902 = vsel %vm325, %v901, 0.0
        %903 = vadd.xlane.f32.xlu0 %v902
        %v904 = vpop.xlane.xlu0 %903
        %v905 = vrcp.pop %v904
        %v906 = vmul.f32 %v901, %v905
        %907 = vrot.lane.b32.xlu0 %v318, 40
        %v908 = vpop.permute.xlu0 %907
        %v911 = vsel %vm325, %v906, 0
        %913 = vmatprep.subr.mxu0 0.0
        %914 = vmatpush1.msra.mxu0 %v908
        %915 = vmatprep.subr.mxu0 0.0
        %916 = vmatpush1.msra.mxu0 0.0
        %917 = vmatprep.subr.mxu0 0.0
        %918 = vmatpush1.msra.mxu0 0.0
        %919 = vmatprep.subr.mxu0 0.0
        %920 = vmatpush1.msra.mxu0 0.0
        %921 = vmatprep.subr.mxu0 0.0
        %922 = vmatpush1.msra.mxu0 0.0
        %923 = vmatprep.subr.mxu0 0.0
        %924 = vmatpush1.msra.mxu0 0.0
        %925 = vmatprep.subr.mxu0 0.0
        %926 = vmatpush1.msra.mxu0 0.0
        %927 = vmatprep.subr.mxu0 0.0
        %928 = vmatpush1.msra.mxu0 0.0
        %929 = vmatprep.subr.mxu0 0.0
        %930 = vmatpush1.msra.mxu0 0.0
        %931 = vmatprep.subr.mxu0 0.0
        %932 = vmatpush1.msra.mxu0 0.0
        %933 = vmatprep.subr.mxu0 0.0
        %934 = vmatpush1.msra.mxu0 0.0
        %935 = vmatprep.subr.mxu0 0.0
        %936 = vmatpush1.msra.mxu0 0.0
        %937 = vmatprep.subr.mxu0 0.0
        %938 = vmatpush1.msra.mxu0 0.0
        %939 = vmatprep.subr.mxu0 0.0
        %940 = vmatpush1.msra.mxu0 0.0
        %941 = vmatprep.subr.mxu0 0.0
        %942 = vmatpush1.msra.mxu0 0.0
        %943 = vmatprep.subr.mxu0 0.0
        %944 = vmatpush1.msra.mxu0 0.0
        %945 = vmatprep.subr.mxu0 0.0
        %946 = vmatpush1.msra.mxu0 0.0
        %947 = vmatprep.subr.mxu0 0.0
        %948 = vmatpush1.msra.mxu0 0.0
        %949 = vmatprep.subr.mxu0 0.0
        %950 = vmatpush1.msra.mxu0 0.0
        %951 = vmatprep.subr.mxu0 0.0
        %952 = vmatpush1.msra.mxu0 0.0
        %953 = vmatprep.subr.mxu0 0.0
        %954 = vmatpush1.msra.mxu0 0.0
        %955 = vmatprep.subr.mxu0 0.0
        %956 = vmatpush1.msra.mxu0 0.0
        %957 = vmatprep.subr.mxu0 0.0
        %958 = vmatpush1.msra.mxu0 0.0
        %959 = vmatprep.subr.mxu0 0.0
        %960 = vmatpush1.msra.mxu0 0.0
        %961 = vmatprep.subr.mxu0 0.0
        %962 = vmatpush1.msra.mxu0 0.0
        %963 = vmatprep.subr.mxu0 0.0
        %964 = vmatpush1.msra.mxu0 0.0
        %965 = vmatprep.subr.mxu0 0.0
        %966 = vmatpush1.msra.mxu0 0.0
        %967 = vmatprep.subr.mxu0 0.0
        %968 = vmatpush1.msra.mxu0 0.0
        %969 = vmatprep.subr.mxu0 0.0
        %970 = vmatpush1.msra.mxu0 0.0
        %971 = vmatprep.subr.mxu0 0.0
        %972 = vmatpush1.msra.mxu0 0.0
        %973 = vmatprep.subr.mxu0 0.0
        %974 = vmatpush1.msra.mxu0 0.0
        %975 = vmatprep.subr.mxu0 0.0
        %976 = vmatpush1.msra.mxu0 0.0
        %977 = vmatprep.mubr.f32.mxu0 0.0
        %978 = vmatmul.mubr.f32.gmra.mrb[0].mxu0 %v911
        %v979 = vpop.f32.mrb[0].mxu0
        %v980 = vadd.f32 0.0, %v979
        %v981 = vpop.f32.mrb[0].mxu0
        %982 = vdwg.mxu0
        %984 = vrot.lane.b32.xlu0 %v650, 8
        %v985 = vpop.permute.xlu0 %984
        %988 = vrot.lane.b32.xlu0 %v815, 16
        %v989 = vpop.permute.xlu0 %988
        %992 = vrot.lane.b32.xlu0 %v980, 24
        %v993 = vpop.permute.xlu0 %992
        %v995 = vsel %vm325, %v485, %v985
        %vm996 = vcmask 130048
        %v997 = vsel %vm996, %v995, %v989
        %vm998 = vcmask 195584
        %v999 = vsel %vm998, %v997, %v993
        %v1000 = vld [vmem:[#allocation7] sm:$0xff]
        %v1001 = vld [vmem:[#allocation7 + $0x8] sm:$0xff]
        %v1002 = vld [vmem:[#allocation7 + $0x10] sm:$0xff]
        %v1003 = vld [vmem:[#allocation7 + $0x18] sm:$0xff]
        %v1004 = vld [vmem:[%s3] sm:$0x1]
        %v1006 = vlaneseq
        %v1007 = vshrl.u32 %v1006, 7
        %v1008 = vsub.s32 0, %v1007
        %v1009 = vrot.slane %v1004, %v1008
        %v1012 = vsel %vm247, %v999, 0
        %1014 = vmatprep.subr.mxu0 0.0
        %1015 = vmatpush1.msra.mxu0 %v1000
        %1016 = vmatprep.subr.mxu0 0.0
        %1017 = vmatpush1.msra.mxu0 %v1001
        %1018 = vmatprep.subr.mxu0 0.0
        %1019 = vmatpush1.msra.mxu0 %v1002
        %1020 = vmatprep.subr.mxu0 0.0
        %1021 = vmatpush1.msra.mxu0 %v1003
        %1022 = vmatprep.subr.mxu0 0.0
        %1023 = vmatpush1.msra.mxu0 0.0
        %1024 = vmatprep.subr.mxu0 0.0
        %1025 = vmatpush1.msra.mxu0 0.0
        %1026 = vmatprep.subr.mxu0 0.0
        %1027 = vmatpush1.msra.mxu0 0.0
        %1028 = vmatprep.subr.mxu0 0.0
        %1029 = vmatpush1.msra.mxu0 0.0
        %1030 = vmatprep.subr.mxu0 0.0
        %1031 = vmatpush1.msra.mxu0 0.0
        %1032 = vmatprep.subr.mxu0 0.0
        %1033 = vmatpush1.msra.mxu0 0.0
        %1034 = vmatprep.subr.mxu0 0.0
        %1035 = vmatpush1.msra.mxu0 0.0
        %1036 = vmatprep.subr.mxu0 0.0
        %1037 = vmatpush1.msra.mxu0 0.0
        %1038 = vmatprep.subr.mxu0 0.0
        %1039 = vmatpush1.msra.mxu0 0.0
        %1040 = vmatprep.subr.mxu0 0.0
        %1041 = vmatpush1.msra.mxu0 0.0
        %1042 = vmatprep.subr.mxu0 0.0
        %1043 = vmatpush1.msra.mxu0 0.0
        %1044 = vmatprep.subr.mxu0 0.0
        %1045 = vmatpush1.msra.mxu0 0.0
        %1046 = vmatprep.subr.mxu0 0.0
        %1047 = vmatpush1.msra.mxu0 0.0
        %1048 = vmatprep.subr.mxu0 0.0
        %1049 = vmatpush1.msra.mxu0 0.0
        %1050 = vmatprep.subr.mxu0 0.0
        %1051 = vmatpush1.msra.mxu0 0.0
        %1052 = vmatprep.subr.mxu0 0.0
        %1053 = vmatpush1.msra.mxu0 0.0
        %1054 = vmatprep.subr.mxu0 0.0
        %1055 = vmatpush1.msra.mxu0 0.0
        %1056 = vmatprep.subr.mxu0 0.0
        %1057 = vmatpush1.msra.mxu0 0.0
        %1058 = vmatprep.subr.mxu0 0.0
        %1059 = vmatpush1.msra.mxu0 0.0
        %1060 = vmatprep.subr.mxu0 0.0
        %1061 = vmatpush1.msra.mxu0 0.0
        %1062 = vmatprep.subr.mxu0 0.0
        %1063 = vmatpush1.msra.mxu0 0.0
        %1064 = vmatprep.subr.mxu0 0.0
        %1065 = vmatpush1.msra.mxu0 0.0
        %1066 = vmatprep.subr.mxu0 0.0
        %1067 = vmatpush1.msra.mxu0 0.0
        %1068 = vmatprep.subr.mxu0 0.0
        %1069 = vmatpush1.msra.mxu0 0.0
        %1070 = vmatprep.subr.mxu0 0.0
        %1071 = vmatpush1.msra.mxu0 0.0
        %1072 = vmatprep.subr.mxu0 0.0
        %1073 = vmatpush1.msra.mxu0 0.0
        %1074 = vmatprep.subr.mxu0 0.0
        %1075 = vmatpush1.msra.mxu0 0.0
        %1076 = vmatprep.subr.mxu0 0.0
        %1077 = vmatpush1.msra.mxu0 0.0
        %1078 = vmatprep.mubr.f32.mxu0 0.0
        %1079 = vmatmul.mubr.f32.gmra.mrb[0].mxu0 %v1012
        %v1080 = vpop.f32.mrb[0].mxu0
        %v1081 = vadd.f32 %v1009, %v1080
        %v1082 = vpop.f32.mrb[0].mxu0
        %1083 = vdwg.mxu0
        %1084 = vst.msk [vmem:[%s241] sm:$0xff] %vm247, %v1081
        %s1085 = sand.u32 %s119, 1
        %s1086 = scalar_lea.sflag [#allocation4], %s1085
        %s1087 = sand.u32 %s119, 1
        %s1088 = smul.addr %s1087, 8
        %s1089 = scalar_lea.vmem [#allocation8], %s1088
        // Predicated region
        $region49: #{tpu_custom_call.1} parent=35 // pred_check
          %p1090 = pneg %p129
        $region50: #{tpu_custom_call.1} parent=35 // pred_check_branch
          %1092 = sbr.rel (%p1090) target = $region52
        $region51: #{tpu_custom_call.1} parent=35 // pred_region
          %s1094 = ssub.s32 128, 128
          %1095 = vsyncadd %s1086, %s1094
          %s1096 = smul.addr %s22, 128
          %s1097 = scalar_lea.hbm %s4, %s1096
          %s1099 = sshll.u32 %s1089, 4
          %s1100 = int_to_ptr.vmem [resolvable:$true] %s1099
          %1102 = dma.vmem_to_hbm [thread:$0]  %s1100, 128, %s1097, %s1086
        $region52: #{tpu_custom_call.1} parent=35 // pred_fallthru
          _
      $region36: #{tpu_custom_call.1} parent=5 // pred_fallthru
        _
      %p1103 = scmp.le.s32.totalorder 2, %s17
      // Predicated region
      $region53: #{tpu_custom_call.1} parent=5 // pred_check
        %p1104 = pneg %p1103
      $region54: #{tpu_custom_call.1} parent=5 // pred_check_branch
        %1106 = sbr.rel (%p1104) target = $region56
      $region55: #{tpu_custom_call.1} parent=5 // pred_region
        %s1107 = ssub.s32 %s17, 2
        // Predicated region
        $region57: #{tpu_custom_call.1} parent=55 // pred_check
          %p1108 = pneg %p135
        $region58: #{tpu_custom_call.1} parent=55 // pred_check_branch
          %1110 = sbr.rel (%p1108) target = $region60
        $region59: #{tpu_custom_call.1} parent=55 // pred_region
          %s1111 = sand.u32 %s120, 1
          %s1112 = scalar_lea.sflag [#allocation4], %s1111
          %s1113 = sand.u32 %s120, 1
          %s1114 = smul.addr %s1113, 8
          %s1115 = scalar_lea.vmem [#allocation8], %s1114
          %1116 = dma.done %s1112, 128
        $region60: #{tpu_custom_call.1} parent=55 // pred_fallthru
          _
      $region56: #{tpu_custom_call.1} parent=5 // pred_fallthru
        _
    $region6: #{tpu_custom_call.1} parent=1 // loop_footer
      %s21 = sadd.s32 1, %s17
    $region7: #{tpu_custom_call.1} parent=1 // loop_footer_branch
      %16 = sbr.rel target = $region3
    $region8: #{tpu_custom_call.1} parent=1 // loop_exit
      _
    %1117 = vsyncpa [#allocation3], 1
    %s1118 = scalar_lea.sflag [#allocation3], 1
    %1119 = vsyncpa %s1118, 1
    %1120 = vsyncpa [#allocation6], 1
    %1121 = vsyncpa [#allocation4], 1
    %s1122 = scalar_lea.sflag [#allocation4], 1
    %1123 = vsyncpa %s1122, 1

</llo_original>
